<compile_context>
chip_gen: v5e
topology: v5e:2x2
jax: 0.10.0
libtpu: 0.0.40
codegen_flags: <defaults>
</compile_context>

<pallas_src>
import math

import jax
import jax.numpy as jnp
from jax.experimental import pallas as pl
from jax.experimental.pallas import tpu as pltpu

OUT_PAD = 128  # lane-dense output slab width (real logits in lanes 0:2)


def clips_kernel(txt_ref, img_ref,
                 wt_ref, bt_ref,      # encode_text stand-in:        (Dt, L_pad), (1, L_pad)
                 wcof_ref, bco_ref,   # encode_image folded @ W_co:  (Di, L_pad), (1, L_pad)
                 wft_ref, bft_ref,    # fc "text" half folded:       (Dt, OUT_PAD), (1, OUT_PAD)
                 wfo_ref, bfo_ref,    # fc "o" half folded:          (Dt, OUT_PAD), (1, OUT_PAD)
                 out_ref):            # result slab:                 (B_tile, OUT_PAD)
    cd = wt_ref.dtype                 # MXU input dtype (bf16 default, or f32)
    txt = txt_ref[...].astype(cd)
    img = img_ref[...].astype(cd)

    # --- encode_text stand-in (MXU, f32 accumulation) ---
    text = jnp.dot(txt, wt_ref[...], preferred_element_type=jnp.float32) + bt_ref[...]

    # --- Co_attention scalar, with encode_image folded offline:
    #     z1 = (img@wi + bi) @ wco == img @ (wi@wco) + bi@wco
    z1 = jnp.dot(img, wcof_ref[...], preferred_element_type=jnp.float32) + bco_ref[...]
    c = jnp.tanh(jnp.sum(z1 * text, axis=-1, keepdims=True))      # (Bt, 1) f32 (VPU/XLU/EUP)

    # --- fc folded offline into txt space (no concat, no lane shuffle) ---
    #     p_t lanes 0:2 = text @ Wt_fc + b_fc ; p_o lanes 0:2 = text @ Wo_fc ; other lanes 0.
    p_t = jnp.dot(txt, wft_ref[...], preferred_element_type=jnp.float32) + bft_ref[...]
    p_o = jnp.dot(txt, wfo_ref[...], preferred_element_type=jnp.float32) + bfo_ref[...]
    # ht = c*text  =>  o = (1-c)*text  =>  concat-fc logits == p_t + (1-c)*p_o
    logits = p_t + (1.0 - c) * p_o
    out_ref[...] = jax.nn.sigmoid(logits)   # lanes 0:2 real; lanes 2: sliced off in wrapper


def clips_forward(txt_in, img_in, kparams, *, b_tile=None):
    """txt_in: (B, Dt) raw text features; img_in: (B, Di) raw image features."""
    B, Dt = txt_in.shape
    Di = img_in.shape[1]
    out_pad = kparams["wft"].shape[1]

    if b_tile is None:
        # Large tiles amortize the ~0.35us/step pipeline overhead and fill the MXU,
        # but keep >= 2 tiles so v7x can shard the batch across its 2 TensorCores.
        half = (B + 1) // 2
        b_tile = min(512, max(8, ((half + 7) // 8) * 8))
    n_tiles = pl.cdiv(B, b_tile)
    b_padded = n_tiles * b_tile

    # Only pad the batch dim (and only when needed) — never materialize a
    # lane-padded activation copy in HBM.
    if b_padded != B:
        txt = jnp.pad(txt_in, ((0, b_padded - B), (0, 0)))
        img = jnp.pad(img_in, ((0, b_padded - B), (0, 0)))
    else:
        txt, img = txt_in, img_in

    batch_spec = lambda d: pl.BlockSpec((b_tile, d), lambda i: (i, 0))
    resident = lambda a: pl.BlockSpec(a.shape, lambda i: (0,) * a.ndim)  # weights stay in VMEM

    out = pl.pallas_call(
        clips_kernel,
        out_shape=jax.ShapeDtypeStruct((b_padded, out_pad), jnp.float32),
        grid_spec=pltpu.PrefetchScalarGridSpec(
            num_scalar_prefetch=0,
            grid=(n_tiles,),
            in_specs=[
                batch_spec(Dt),                # txt tile (pipelined over batch, native width)
                batch_spec(Di),                # img tile (pipelined over batch, native width)
                resident(kparams["wt"]),
                resident(kparams["bt"]),
                resident(kparams["wcof"]),
                resident(kparams["bco"]),
                resident(kparams["wft"]),
                resident(kparams["bft"]),
                resident(kparams["wfo"]),
                resident(kparams["bfo"]),
            ],
            out_specs=pl.BlockSpec((b_tile, out_pad), lambda i: (i, 0)),
        ),
        compiler_params=pltpu.CompilerParams(
            dimension_semantics=("parallel",),   # shard batch tiles across TCs on v7x
        ),
    )(txt, img,
      kparams["wt"], kparams["bt"], kparams["wcof"], kparams["bco"],
      kparams["wft"], kparams["bft"], kparams["wfo"], kparams["bfo"])

    return out[:B, :2]   # strip batch padding + lane padding in the JAX wrapper


def init_raw_params(key, L, Dt, Di):
    """Raw (unfolded, unpadded) params, PyTorch-default-style init."""
    ks = jax.random.split(key, 8)
    wt = jax.random.uniform(ks[0], (Dt, L), jnp.float32,
                            -1.0 / math.sqrt(Dt), 1.0 / math.sqrt(Dt))
    bt = jax.random.uniform(ks[1], (1, L), jnp.float32,
                            -1.0 / math.sqrt(Dt), 1.0 / math.sqrt(Dt))
    wi = jax.random.uniform(ks[2], (Di, L), jnp.float32,
                            -1.0 / math.sqrt(Di), 1.0 / math.sqrt(Di))
    bi = jax.random.uniform(ks[3], (1, L), jnp.float32,
                            -1.0 / math.sqrt(Di), 1.0 / math.sqrt(Di))
    # Co_attention: kaiming_uniform_(a=sqrt(5)) on (L, L) -> U(-1/sqrt(L), 1/sqrt(L))
    wco = jax.random.uniform(ks[4], (L, L), jnp.float32,
                             -1.0 / math.sqrt(L), 1.0 / math.sqrt(L))
    # fc: Linear(2L -> 2); stored transposed (2L, 2).
    bound = 1.0 / math.sqrt(2 * L)
    wfc = jax.random.uniform(ks[5], (2 * L, 2), jnp.float32, -bound, bound)
    bfc = jax.random.uniform(ks[6], (1, 2), jnp.float32, -bound, bound)
    return {"wt": wt, "bt": bt, "wi": wi, "bi": bi, "wco": wco, "wfc": wfc, "bfc": bfc}


def fold_params(raw, L, weight_dtype=jnp.bfloat16):
    """Exact offline algebraic folds + lane padding; MXU weights pre-cast once."""
    def rpad(x):
        return pl.cdiv(x, 128) * 128

    def pad_cols(x, n):
        return jnp.zeros((x.shape[0], n), jnp.float32).at[:, :x.shape[1]].set(x)

    wt, bt, wi, bi = raw["wt"], raw["bt"], raw["wi"], raw["bi"]
    wco, wfc, bfc = raw["wco"], raw["wfc"], raw["bfc"]
    l_pad = rpad(L)

    wfc_t, wfc_o = wfc[:L], wfc[L:]          # the two halves of the concat-fc weight

    wcof = wi @ wco                          # encode_image folded into Co_attention
    bco = bi @ wco
    wft = wt @ wfc_t                         # fc "text" half folded into txt space
    bft = bt @ wfc_t + bfc
    wfo = wt @ wfc_o                         # fc "o" half folded into txt space
    bfo = bt @ wfc_o

    return {
        "wt":   pad_cols(wt,   l_pad).astype(weight_dtype),
        "bt":   pad_cols(bt,   l_pad),                       # biases stay f32
        "wcof": pad_cols(wcof, l_pad).astype(weight_dtype),
        "bco":  pad_cols(bco,  l_pad),
        "wft":  pad_cols(wft,  OUT_PAD).astype(weight_dtype),
        "bft":  pad_cols(bft,  OUT_PAD),
        "wfo":  pad_cols(wfo,  OUT_PAD).astype(weight_dtype),
        "bfo":  pad_cols(bfo,  OUT_PAD),
    }


def clips_reference(txt_in, img_in, p):
    """Pure-JAX reference mirroring the PyTorch forward exactly."""
    text = txt_in @ p["wt"] + p["bt"]
    image = img_in @ p["wi"] + p["bi"]
    # Co_attention with H=image[:,None,:], T=text[:,None,:]
    z1 = image[:, None, :] @ p["wco"]                       # (B,1,L)
    z2 = z1 @ jnp.transpose(text[:, None, :], (0, 2, 1))    # (B,1,1)
    C = jnp.tanh(z2)
    HT = (C @ text[:, None, :]).reshape(text.shape[0], -1)  # (B,L)
    o = text - HT
    cat = jnp.concatenate([text, o], axis=1)
    return jax.nn.sigmoid(cat @ p["wfc"] + p["bfc"])


if __name__ == "__main__":
    # batch, opt['len'], raw text feat dim, raw image feat dim (small example shapes).
    B, L, Dt, Di = 16, 32, 64, 64

    key = jax.random.PRNGKey(0)
    k_txt, k_img, k_p = jax.random.split(key, 3)
    # input[self.input1] / input[self.input2] stand-ins (pre-embedded, see TODO above).
    inputs = {
        "text": jax.random.normal(k_txt, (B, Dt), jnp.float32),
        "image": jax.random.normal(k_img, (B, Di), jnp.float32),
    }
    raw = init_raw_params(k_p, L, Dt, Di)
    ref = clips_reference(inputs["text"], inputs["image"], raw)

    # f32 MXU path (strict clip.float() parity; folds are exact identities modulo rounding).
    kp_f32 = fold_params(raw, L, weight_dtype=jnp.float32)
    result = clips_forward(inputs["text"], inputs["image"], kp_f32)
    jax.block_until_ready(result)
    assert result.shape == (B, 2)
    assert jnp.allclose(result, ref, atol=1e-4, rtol=1e-4)

    # bf16 MXU path (default: pre-cast weights, f32 accumulation + f32 elementwise tail).
    kp_bf16 = fold_params(raw, L)   # weight_dtype defaults to bf16
    result_bf16 = clips_forward(inputs["text"], inputs["image"], kp_bf16)
    jax.block_until_ready(result_bf16)
    assert jnp.allclose(result_bf16, ref, atol=5e-2, rtol=0)

    print("KERNEL_OK")
</pallas_src>

<mosaic_0001>
module attributes {stable_mosaic.version = 11 : i64} {
  func.func @clips_kernel(%arg0: i32, %arg1: memref<8x64xf32, #tpu.memory_space<vmem>>, %arg2: memref<8x64xf32, #tpu.memory_space<vmem>>, %arg3: memref<64x128xf32, #tpu.memory_space<vmem>>, %arg4: memref<1x128xf32, #tpu.memory_space<vmem>>, %arg5: memref<64x128xf32, #tpu.memory_space<vmem>>, %arg6: memref<1x128xf32, #tpu.memory_space<vmem>>, %arg7: memref<64x128xf32, #tpu.memory_space<vmem>>, %arg8: memref<1x128xf32, #tpu.memory_space<vmem>>, %arg9: memref<64x128xf32, #tpu.memory_space<vmem>>, %arg10: memref<1x128xf32, #tpu.memory_space<vmem>>, %arg11: memref<8x128xf32, #tpu.memory_space<vmem>>) attributes {dimension_semantics = [#tpu.dimension_semantics<parallel>], iteration_bounds = array<i64: 2>, scalar_prefetch = 0 : i64, scratch_operands = 0 : i64, tpu.core_type = #tpu.core_type<tc>, window_params = [{transform_indices = @transform_0, window_bounds = array<i64: 8, 64>}, {transform_indices = @transform_1, window_bounds = array<i64: 8, 64>}, {pipeline_mode = #tpu.pipeline_mode<synchronous>, transform_indices = @transform_2, window_bounds = array<i64: 64, 128>}, {pipeline_mode = #tpu.pipeline_mode<synchronous>, transform_indices = @transform_3, window_bounds = array<i64: 1, 128>}, {pipeline_mode = #tpu.pipeline_mode<synchronous>, transform_indices = @transform_4, window_bounds = array<i64: 64, 128>}, {pipeline_mode = #tpu.pipeline_mode<synchronous>, transform_indices = @transform_5, window_bounds = array<i64: 1, 128>}, {pipeline_mode = #tpu.pipeline_mode<synchronous>, transform_indices = @transform_6, window_bounds = array<i64: 64, 128>}, {pipeline_mode = #tpu.pipeline_mode<synchronous>, transform_indices = @transform_7, window_bounds = array<i64: 1, 128>}, {pipeline_mode = #tpu.pipeline_mode<synchronous>, transform_indices = @transform_8, window_bounds = array<i64: 64, 128>}, {pipeline_mode = #tpu.pipeline_mode<synchronous>, transform_indices = @transform_9, window_bounds = array<i64: 1, 128>}, {transform_indices = @transform_10, window_bounds = array<i64: 8, 128>}]} {
    %c0 = arith.constant 0 : index
    %c0_0 = arith.constant 0 : index
    %0 = vector.load %arg1[%c0, %c0_0] : memref<8x64xf32, #tpu.memory_space<vmem>>, vector<8x64xf32>
    %c0_1 = arith.constant 0 : index
    %c0_2 = arith.constant 0 : index
    %1 = vector.load %arg2[%c0_1, %c0_2] : memref<8x64xf32, #tpu.memory_space<vmem>>, vector<8x64xf32>
    %c0_3 = arith.constant 0 : index
    %c0_4 = arith.constant 0 : index
    %2 = vector.load %arg3[%c0_3, %c0_4] : memref<64x128xf32, #tpu.memory_space<vmem>>, vector<64x128xf32>
    %cst = arith.constant dense<0.000000e+00> : vector<8x128xf32>
    %3 = tpu.matmul %0, %2, %cst {dimension_numbers = #tpu.dot_dimension_numbers<[1], [0], [0], [1], [0, 0, 1, 1], [], []>} : vector<8x64xf32>, vector<64x128xf32>, vector<8x128xf32> -> vector<8x128xf32>
    %c0_5 = arith.constant 0 : index
    %c0_6 = arith.constant 0 : index
    %4 = vector.load %arg4[%c0_5, %c0_6] : memref<1x128xf32, #tpu.memory_space<vmem>>, vector<1x128xf32>
    %5 = vector.broadcast %4 : vector<1x128xf32> to vector<8x128xf32>
    %6 = arith.addf %3, %5 : vector<8x128xf32>
    %c0_7 = arith.constant 0 : index
    %c0_8 = arith.constant 0 : index
    %7 = vector.load %arg5[%c0_7, %c0_8] : memref<64x128xf32, #tpu.memory_space<vmem>>, vector<64x128xf32>
    %cst_9 = arith.constant dense<0.000000e+00> : vector<8x128xf32>
    %8 = tpu.matmul %1, %7, %cst_9 {dimension_numbers = #tpu.dot_dimension_numbers<[1], [0], [0], [1], [0, 0, 1, 1], [], []>} : vector<8x64xf32>, vector<64x128xf32>, vector<8x128xf32> -> vector<8x128xf32>
    %c0_10 = arith.constant 0 : index
    %c0_11 = arith.constant 0 : index
    %9 = vector.load %arg6[%c0_10, %c0_11] : memref<1x128xf32, #tpu.memory_space<vmem>>, vector<1x128xf32>
    %10 = vector.broadcast %9 : vector<1x128xf32> to vector<8x128xf32>
    %11 = arith.addf %8, %10 : vector<8x128xf32>
    %12 = arith.mulf %11, %6 : vector<8x128xf32>
    %cst_12 = arith.constant dense<0.000000e+00> : vector<8xf32>
    %13 = vector.multi_reduction <add>, %12, %cst_12 [1] : vector<8x128xf32> to vector<8xf32>
    %14 = vector.shape_cast %13 : vector<8xf32> to vector<8x1xf32>
    %15 = math.tanh %14 : vector<8x1xf32>
    %c0_13 = arith.constant 0 : index
    %c0_14 = arith.constant 0 : index
    %16 = vector.load %arg7[%c0_13, %c0_14] : memref<64x128xf32, #tpu.memory_space<vmem>>, vector<64x128xf32>
    %cst_15 = arith.constant dense<0.000000e+00> : vector<8x128xf32>
    %17 = tpu.matmul %0, %16, %cst_15 {dimension_numbers = #tpu.dot_dimension_numbers<[1], [0], [0], [1], [0, 0, 1, 1], [], []>} : vector<8x64xf32>, vector<64x128xf32>, vector<8x128xf32> -> vector<8x128xf32>
    %c0_16 = arith.constant 0 : index
    %c0_17 = arith.constant 0 : index
    %18 = vector.load %arg8[%c0_16, %c0_17] : memref<1x128xf32, #tpu.memory_space<vmem>>, vector<1x128xf32>
    %19 = vector.broadcast %18 : vector<1x128xf32> to vector<8x128xf32>
    %20 = arith.addf %17, %19 : vector<8x128xf32>
    %c0_18 = arith.constant 0 : index
    %c0_19 = arith.constant 0 : index
    %21 = vector.load %arg9[%c0_18, %c0_19] : memref<64x128xf32, #tpu.memory_space<vmem>>, vector<64x128xf32>
    %cst_20 = arith.constant dense<0.000000e+00> : vector<8x128xf32>
    %22 = tpu.matmul %0, %21, %cst_20 {dimension_numbers = #tpu.dot_dimension_numbers<[1], [0], [0], [1], [0, 0, 1, 1], [], []>} : vector<8x64xf32>, vector<64x128xf32>, vector<8x128xf32> -> vector<8x128xf32>
    %c0_21 = arith.constant 0 : index
    %c0_22 = arith.constant 0 : index
    %23 = vector.load %arg10[%c0_21, %c0_22] : memref<1x128xf32, #tpu.memory_space<vmem>>, vector<1x128xf32>
    %24 = vector.broadcast %23 : vector<1x128xf32> to vector<8x128xf32>
    %25 = arith.addf %22, %24 : vector<8x128xf32>
    %cst_23 = arith.constant 1.000000e+00 : f32
    %26 = vector.broadcast %cst_23 : f32 to vector<8x1xf32>
    %27 = arith.subf %26, %15 : vector<8x1xf32>
    %28 = vector.broadcast %27 : vector<8x1xf32> to vector<8x128xf32>
    %29 = arith.mulf %28, %25 : vector<8x128xf32>
    %30 = arith.addf %20, %29 : vector<8x128xf32>
    %31 = arith.negf %30 : vector<8x128xf32>
    %32 = math.exp %31 : vector<8x128xf32>
    %cst_24 = arith.constant 1.000000e+00 : f32
    %33 = vector.broadcast %cst_24 : f32 to vector<8x128xf32>
    %34 = arith.addf %33, %32 : vector<8x128xf32>
    %35 = arith.divf %33, %34 : vector<8x128xf32>
    %c0_25 = arith.constant 0 : index
    %c0_26 = arith.constant 0 : index
    %36 = vector.load %arg11[%c0_25, %c0_26] : memref<8x128xf32, #tpu.memory_space<vmem>>, vector<8x128xf32>
    tpu.vector_store %arg11[%c0_25, %c0_26], %35 {strides = array<i32>} : memref<8x128xf32, #tpu.memory_space<vmem>>, vector<8x128xf32>,
    return
  }
  func.func @transform_0(%arg0: i32) -> (i32, i32) {
    %c0_i32 = arith.constant 0 : i32
    %c0_i32_0 = arith.constant 0 : i32
    return %arg0, %c0_i32 : i32, i32
  }
  func.func @transform_1(%arg0: i32) -> (i32, i32) {
    %c0_i32 = arith.constant 0 : i32
    %c0_i32_0 = arith.constant 0 : i32
    return %arg0, %c0_i32 : i32, i32
  }
  func.func @transform_2(%arg0: i32) -> (i32, i32) {
    %c0_i32 = arith.constant 0 : i32
    %c0_i32_0 = arith.constant 0 : i32
    %c0_i32_1 = arith.constant 0 : i32
    return %c0_i32, %c0_i32_0 : i32, i32
  }
  func.func @transform_3(%arg0: i32) -> (i32, i32) {
    %c0_i32 = arith.constant 0 : i32
    %c0_i32_0 = arith.constant 0 : i32
    %c0_i32_1 = arith.constant 0 : i32
    return %c0_i32, %c0_i32_0 : i32, i32
  }
  func.func @transform_4(%arg0: i32) -> (i32, i32) {
    %c0_i32 = arith.constant 0 : i32
    %c0_i32_0 = arith.constant 0 : i32
    %c0_i32_1 = arith.constant 0 : i32
    return %c0_i32, %c0_i32_0 : i32, i32
  }
  func.func @transform_5(%arg0: i32) -> (i32, i32) {
    %c0_i32 = arith.constant 0 : i32
    %c0_i32_0 = arith.constant 0 : i32
    %c0_i32_1 = arith.constant 0 : i32
    return %c0_i32, %c0_i32_0 : i32, i32
  }
  func.func @transform_6(%arg0: i32) -> (i32, i32) {
    %c0_i32 = arith.constant 0 : i32
    %c0_i32_0 = arith.constant 0 : i32
    %c0_i32_1 = arith.constant 0 : i32
    return %c0_i32, %c0_i32_0 : i32, i32
  }
  func.func @transform_7(%arg0: i32) -> (i32, i32) {
    %c0_i32 = arith.constant 0 : i32
    %c0_i32_0 = arith.constant 0 : i32
    %c0_i32_1 = arith.constant 0 : i32
    return %c0_i32, %c0_i32_0 : i32, i32
  }
  func.func @transform_8(%arg0: i32) -> (i32, i32) {
    %c0_i32 = arith.constant 0 : i32
    %c0_i32_0 = arith.constant 0 : i32
    %c0_i32_1 = arith.constant 0 : i32
    return %c0_i32, %c0_i32_0 : i32, i32
  }
  func.func @transform_9(%arg0: i32) -> (i32, i32) {
    %c0_i32 = arith.constant 0 : i32
    %c0_i32_0 = arith.constant 0 : i32
    %c0_i32_1 = arith.constant 0 : i32
    return %c0_i32, %c0_i32_0 : i32, i32
  }
  func.func @transform_10(%arg0: i32) -> (i32, i32) {
    %c0_i32 = arith.constant 0 : i32
    %c0_i32_0 = arith.constant 0 : i32
    return %arg0, %c0_i32 : i32, i32
  }
}

</mosaic_0001>

<llo_original>
// kernel: tpu_custom_call.1
$region0: #{tpu_custom_call.1}
  #allocation0 [shape = 'u32[]', space=smem, size = 0x4, offset = 0x4, fixed_abs, tag = 'smem constant byte address 0x4 - core index']
  #allocation1 [shape = 'u32[72,128]{1,0:T(1,128)}', space=vmem, size = 0x9000, scoped, tag = 'internal scratch']
  %s0 = inlined_call_operand.hbm [shape: f32[16,64], index: 0, kind: input, shape index: {}]
  %s1 = inlined_call_operand.hbm [shape: f32[16,64], index: 1, kind: input, shape index: {}]
  %s2 = inlined_call_operand.hbm [shape: f32[64,128], index: 2, kind: input, shape index: {}]
  %s3 = inlined_call_operand.vmem [shape: f32[1,128], index: 3, kind: input, shape index: {}]
  %s4 = inlined_call_operand.hbm [shape: f32[64,128], index: 4, kind: input, shape index: {}]
  %s5 = inlined_call_operand.vmem [shape: f32[1,128], index: 5, kind: input, shape index: {}]
  %s6 = inlined_call_operand.hbm [shape: f32[64,128], index: 6, kind: input, shape index: {}]
  %s7 = inlined_call_operand.vmem [shape: f32[1,128], index: 7, kind: input, shape index: {}]
  %s8 = inlined_call_operand.hbm [shape: f32[64,128], index: 8, kind: input, shape index: {}]
  %s9 = inlined_call_operand.vmem [shape: f32[1,128], index: 9, kind: input, shape index: {}]
  %s10 = inlined_call_operand.hbm [shape: f32[16,128], index: 10, kind: output, shape index: {}]
  %s11 = sld [smem:[#allocation0]]
  $region97: #{tpu_custom_call.1} parent=0
    _
  %s13 = ssub.s32 1, %s11
  %s14 = scalar_select 0, %s13, %s11
  $region1: #{tpu_custom_call.1} parent=0
    #allocation2 [shape = 'u8[8192]{0}', space=vmem, size = 0x2000, scoped, tag = 'input window, operand 0']
    #allocation3 [shape = 's32[2]{0}', space=sflag, size = 0x8, scoped, tag = 'scoped memory for tpu_custom_call.1']
    #allocation4 [shape = 's32[2]{0}', space=sflag, size = 0x8, scoped, tag = 'scoped memory for tpu_custom_call.1']
    #allocation5 [shape = 'u8[8192]{0}', space=vmem, size = 0x2000, scoped, tag = 'input window, operand 1']
    #allocation6 [shape = 's32[2]{0}', space=sflag, size = 0x8, scoped, tag = 'scoped memory for tpu_custom_call.1']
    #allocation7 [shape = 'u8[32768]{0}', space=vmem, size = 0x8000, scoped, tag = 'input window, operand 2, single buffered']
    #allocation8 [shape = 'u8[32768]{0}', space=vmem, size = 0x8000, scoped, tag = 'input window, operand 4, single buffered']
    #allocation9 [shape = 's32[1]{0}', space=sflag, size = 0x4, scoped, tag = 'scoped memory for tpu_custom_call.1']
    #allocation10 [shape = 'u8[32768]{0}', space=vmem, size = 0x8000, scoped, tag = 'input window, operand 6, single buffered']
    #allocation11 [shape = 'u8[32768]{0}', space=vmem, size = 0x8000, scoped, tag = 'input window, operand 8, single buffered']
    #allocation12 [shape = 's32[1]{0}', space=sflag, size = 0x4, scoped, tag = 'scoped memory for tpu_custom_call.1']
    #allocation13 [shape = 'u8[8192]{0}', space=vmem, size = 0x2000, scoped, tag = 'output window, operand 0']
    %15 = vsyncpa [#allocation3], 0
    %s16 = scalar_lea.sflag [#allocation3], 1
    %17 = vsyncpa %s16, 0
    %18 = vsyncpa [#allocation6], 0
    %s19 = scalar_lea.sflag [#allocation6], 1
    %20 = vsyncpa %s19, 0
    %21 = vsyncpa [#allocation9], 0
    %22 = vsyncpa [#allocation12], 0
    %23 = vsyncpa [#allocation4], 0
    %s24 = scalar_lea.sflag [#allocation4], 1
    %25 = vsyncpa %s24, 0
    loop: start=0, step=1, limit=4
    $region2: #{tpu_custom_call.1} parent=1 // loop_pre_header
      _
    $region3: #{tpu_custom_call.1} parent=1 // loop_header
      %s27 = sphi 0, %s31
      %p28 = scmp.ge.s32.totalorder %s27, 4
      %s37 = sphi 0, %s39
      %s40 = sphi 0, %s37
      %s41 = sphi 0, %s40
      %s57 = sphi 0, %s41
      %s63 = sphi 0, %s65
      %s66 = sphi 0, %s63
      %s67 = sphi 0, %s66
      %s83 = sphi 0, %s67
      %s87 = sphi 0, %s87
      %s89 = sphi 0, %s87
      %s90 = sphi 0, %s89
      %s104 = sphi 0, %s90
      %s108 = sphi 0, %s108
      %s110 = sphi 0, %s108
      %s111 = sphi 0, %s110
      %s125 = sphi 0, %s111
      %s129 = sphi 0, %s129
      %s131 = sphi 0, %s129
      %s132 = sphi 0, %s131
      %s146 = sphi 0, %s132
      %s150 = sphi 0, %s150
      %s152 = sphi 0, %s150
      %s153 = sphi 0, %s152
      %s167 = sphi 0, %s153
      %s171 = sphi 0, %s171
      %s173 = sphi 0, %s171
      %s174 = sphi 0, %s173
      %s188 = sphi 0, %s174
      %s192 = sphi 0, %s192
      %s194 = sphi 0, %s192
      %s195 = sphi 0, %s194
      %s209 = sphi 0, %s195
      %s213 = sphi 0, %s213
      %s215 = sphi 0, %s213
      %s216 = sphi 0, %s215
      %s230 = sphi 0, %s216
      %s234 = sphi 0, %s234
      %s236 = sphi 0, %s234
      %s237 = sphi 0, %s236
      %s251 = sphi 0, %s237
      %s257 = sphi 0, %s259
      %s260 = sphi 0, %s257
      %s261 = sphi 0, %s260
      %s277 = sphi 0, %s261
    $region4: #{tpu_custom_call.1} parent=1 // loop_header_branch
      %30 = sbr.rel (%p28) target = $region8
    $region5: #{tpu_custom_call.1} parent=1 // loop_body
      %s32 = ssub.s32 %s27, 1
      %s33 = ssub.s32 %s27, 2
      %s34 = sadd.s32 %s27, 1
      %s35 = ssub.s32 %s27, %s34
      %p36 = scmp.eq.s32.totalorder %s35, 0
      %s38 = sadd.s32 %s37, 1
      %s39 = scalar_select %p36, %s37, %s38
      %p42 = pneg %p36
      %p43 = scmp.eq.s32.totalorder %s27, 1
      %p44 = por %p42, %p43
      %p45 = scmp.ne.s32.totalorder %s37, %s40
      %p46 = scmp.eq.s32.totalorder %s27, 0
      %p47 = por %p45, %p46
      %p48 = scmp.ne.s32.totalorder %s37, %s40
      %p49 = scmp.eq.s32.totalorder %s32, 1
      %p50 = por %p48, %p49
      %p51 = scmp.ne.s32.totalorder %s40, %s41
      %p52 = scmp.eq.s32.totalorder %s32, 0
      %p53 = por %p51, %p52
      %p54 = scmp.ne.s32.totalorder %s40, %s41
      %p55 = scmp.eq.s32.totalorder %s33, 1
      %p56 = por %p54, %p55
      %p58 = scmp.ne.s32.totalorder %s41, %s57
      %p59 = scmp.eq.s32.totalorder %s33, 0
      %p60 = por %p58, %p59
      %s61 = ssub.s32 %s27, %s34
      %p62 = scmp.eq.s32.totalorder %s61, 0
      %s64 = sadd.s32 %s63, 1
      %s65 = scalar_select %p62, %s63, %s64
      %p68 = pneg %p62
      %p69 = scmp.eq.s32.totalorder %s27, 1
      %p70 = por %p68, %p69
      %p71 = scmp.ne.s32.totalorder %s63, %s66
      %p72 = scmp.eq.s32.totalorder %s27, 0
      %p73 = por %p71, %p72
      %p74 = scmp.ne.s32.totalorder %s63, %s66
      %p75 = scmp.eq.s32.totalorder %s32, 1
      %p76 = por %p74, %p75
      %p77 = scmp.ne.s32.totalorder %s66, %s67
      %p78 = scmp.eq.s32.totalorder %s32, 0
      %p79 = por %p77, %p78
      %p80 = scmp.ne.s32.totalorder %s66, %s67
      %p81 = scmp.eq.s32.totalorder %s33, 1
      %p82 = por %p80, %p81
      %p84 = scmp.ne.s32.totalorder %s67, %s83
      %p85 = scmp.eq.s32.totalorder %s33, 0
      %p86 = por %p84, %p85
      %s88 = sadd.s32 %s87, 1
      %p91 = scmp.eq.s32.totalorder %s27, 1
      %p92 = scmp.ne.s32.totalorder %s87, %s89
      %p93 = scmp.eq.s32.totalorder %s27, 0
      %p94 = por %p92, %p93
      %p95 = scmp.ne.s32.totalorder %s87, %s89
      %p96 = scmp.eq.s32.totalorder %s32, 1
      %p97 = por %p95, %p96
      %p98 = scmp.ne.s32.totalorder %s89, %s90
      %p99 = scmp.eq.s32.totalorder %s32, 0
      %p100 = por %p98, %p99
      %p101 = scmp.ne.s32.totalorder %s89, %s90
      %p102 = scmp.eq.s32.totalorder %s33, 1
      %p103 = por %p101, %p102
      %p105 = scmp.ne.s32.totalorder %s90, %s104
      %p106 = scmp.eq.s32.totalorder %s33, 0
      %p107 = por %p105, %p106
      %s109 = sadd.s32 %s108, 1
      %p112 = scmp.eq.s32.totalorder %s27, 1
      %p113 = scmp.ne.s32.totalorder %s108, %s110
      %p114 = scmp.eq.s32.totalorder %s27, 0
      %p115 = por %p113, %p114
      %p116 = scmp.ne.s32.totalorder %s108, %s110
      %p117 = scmp.eq.s32.totalorder %s32, 1
      %p118 = por %p116, %p117
      %p119 = scmp.ne.s32.totalorder %s110, %s111
      %p120 = scmp.eq.s32.totalorder %s32, 0
      %p121 = por %p119, %p120
      %p122 = scmp.ne.s32.totalorder %s110, %s111
      %p123 = scmp.eq.s32.totalorder %s33, 1
      %p124 = por %p122, %p123
      %p126 = scmp.ne.s32.totalorder %s111, %s125
      %p127 = scmp.eq.s32.totalorder %s33, 0
      %p128 = por %p126, %p127
      %s130 = sadd.s32 %s129, 1
      %p133 = scmp.eq.s32.totalorder %s27, 1
      %p134 = scmp.ne.s32.totalorder %s129, %s131
      %p135 = scmp.eq.s32.totalorder %s27, 0
      %p136 = por %p134, %p135
      %p137 = scmp.ne.s32.totalorder %s129, %s131
      %p138 = scmp.eq.s32.totalorder %s32, 1
      %p139 = por %p137, %p138
      %p140 = scmp.ne.s32.totalorder %s131, %s132
      %p141 = scmp.eq.s32.totalorder %s32, 0
      %p142 = por %p140, %p141
      %p143 = scmp.ne.s32.totalorder %s131, %s132
      %p144 = scmp.eq.s32.totalorder %s33, 1
      %p145 = por %p143, %p144
      %p147 = scmp.ne.s32.totalorder %s132, %s146
      %p148 = scmp.eq.s32.totalorder %s33, 0
      %p149 = por %p147, %p148
      %s151 = sadd.s32 %s150, 1
      %p154 = scmp.eq.s32.totalorder %s27, 1
      %p155 = scmp.ne.s32.totalorder %s150, %s152
      %p156 = scmp.eq.s32.totalorder %s27, 0
      %p157 = por %p155, %p156
      %p158 = scmp.ne.s32.totalorder %s150, %s152
      %p159 = scmp.eq.s32.totalorder %s32, 1
      %p160 = por %p158, %p159
      %p161 = scmp.ne.s32.totalorder %s152, %s153
      %p162 = scmp.eq.s32.totalorder %s32, 0
      %p163 = por %p161, %p162
      %p164 = scmp.ne.s32.totalorder %s152, %s153
      %p165 = scmp.eq.s32.totalorder %s33, 1
      %p166 = por %p164, %p165
      %p168 = scmp.ne.s32.totalorder %s153, %s167
      %p169 = scmp.eq.s32.totalorder %s33, 0
      %p170 = por %p168, %p169
      %s172 = sadd.s32 %s171, 1
      %p175 = scmp.eq.s32.totalorder %s27, 1
      %p176 = scmp.ne.s32.totalorder %s171, %s173
      %p177 = scmp.eq.s32.totalorder %s27, 0
      %p178 = por %p176, %p177
      %p179 = scmp.ne.s32.totalorder %s171, %s173
      %p180 = scmp.eq.s32.totalorder %s32, 1
      %p181 = por %p179, %p180
      %p182 = scmp.ne.s32.totalorder %s173, %s174
      %p183 = scmp.eq.s32.totalorder %s32, 0
      %p184 = por %p182, %p183
      %p185 = scmp.ne.s32.totalorder %s173, %s174
      %p186 = scmp.eq.s32.totalorder %s33, 1
      %p187 = por %p185, %p186
      %p189 = scmp.ne.s32.totalorder %s174, %s188
      %p190 = scmp.eq.s32.totalorder %s33, 0
      %p191 = por %p189, %p190
      %s193 = sadd.s32 %s192, 1
      %p196 = scmp.eq.s32.totalorder %s27, 1
      %p197 = scmp.ne.s32.totalorder %s192, %s194
      %p198 = scmp.eq.s32.totalorder %s27, 0
      %p199 = por %p197, %p198
      %p200 = scmp.ne.s32.totalorder %s192, %s194
      %p201 = scmp.eq.s32.totalorder %s32, 1
      %p202 = por %p200, %p201
      %p203 = scmp.ne.s32.totalorder %s194, %s195
      %p204 = scmp.eq.s32.totalorder %s32, 0
      %p205 = por %p203, %p204
      %p206 = scmp.ne.s32.totalorder %s194, %s195
      %p207 = scmp.eq.s32.totalorder %s33, 1
      %p208 = por %p206, %p207
      %p210 = scmp.ne.s32.totalorder %s195, %s209
      %p211 = scmp.eq.s32.totalorder %s33, 0
      %p212 = por %p210, %p211
      %s214 = sadd.s32 %s213, 1
      %p217 = scmp.eq.s32.totalorder %s27, 1
      %p218 = scmp.ne.s32.totalorder %s213, %s215
      %p219 = scmp.eq.s32.totalorder %s27, 0
      %p220 = por %p218, %p219
      %p221 = scmp.ne.s32.totalorder %s213, %s215
      %p222 = scmp.eq.s32.totalorder %s32, 1
      %p223 = por %p221, %p222
      %p224 = scmp.ne.s32.totalorder %s215, %s216
      %p225 = scmp.eq.s32.totalorder %s32, 0
      %p226 = por %p224, %p225
      %p227 = scmp.ne.s32.totalorder %s215, %s216
      %p228 = scmp.eq.s32.totalorder %s33, 1
      %p229 = por %p227, %p228
      %p231 = scmp.ne.s32.totalorder %s216, %s230
      %p232 = scmp.eq.s32.totalorder %s33, 0
      %p233 = por %p231, %p232
      %s235 = sadd.s32 %s234, 1
      %p238 = scmp.eq.s32.totalorder %s27, 1
      %p239 = scmp.ne.s32.totalorder %s234, %s236
      %p240 = scmp.eq.s32.totalorder %s27, 0
      %p241 = por %p239, %p240
      %p242 = scmp.ne.s32.totalorder %s234, %s236
      %p243 = scmp.eq.s32.totalorder %s32, 1
      %p244 = por %p242, %p243
      %p245 = scmp.ne.s32.totalorder %s236, %s237
      %p246 = scmp.eq.s32.totalorder %s32, 0
      %p247 = por %p245, %p246
      %p248 = scmp.ne.s32.totalorder %s236, %s237
      %p249 = scmp.eq.s32.totalorder %s33, 1
      %p250 = por %p248, %p249
      %p252 = scmp.ne.s32.totalorder %s237, %s251
      %p253 = scmp.eq.s32.totalorder %s33, 0
      %p254 = por %p252, %p253
      %s255 = ssub.s32 %s27, %s34
      %p256 = scmp.eq.s32.totalorder %s255, 0
      %s258 = sadd.s32 %s257, 1
      %s259 = scalar_select %p256, %s257, %s258
      %p262 = pneg %p256
      %p263 = scmp.eq.s32.totalorder %s27, 1
      %p264 = por %p262, %p263
      %p265 = scmp.ne.s32.totalorder %s257, %s260
      %p266 = scmp.eq.s32.totalorder %s27, 0
      %p267 = por %p265, %p266
      %p268 = scmp.ne.s32.totalorder %s257, %s260
      %p269 = scmp.eq.s32.totalorder %s32, 1
      %p270 = por %p268, %p269
      %p271 = scmp.ne.s32.totalorder %s260, %s261
      %p272 = scmp.eq.s32.totalorder %s32, 0
      %p273 = por %p271, %p272
      %p274 = scmp.ne.s32.totalorder %s260, %s261
      %p275 = scmp.eq.s32.totalorder %s33, 1
      %p276 = por %p274, %p275
      %p278 = scmp.ne.s32.totalorder %s261, %s277
      %p279 = scmp.eq.s32.totalorder %s33, 0
      %p280 = por %p278, %p279
      %p281 = scmp.le.s32.totalorder 1, %s27
      %p282 = scmp.lt.s32.totalorder %s27, 3
      %p283 = pnand %p281, %p282
      %p284 = pneg %p283
      // Predicated region
      $region9: #{tpu_custom_call.1} parent=5 // pred_check
        _
      $region10: #{tpu_custom_call.1} parent=5 // pred_check_branch
        %286 = sbr.rel (%p283) target = $region12
      $region11: #{tpu_custom_call.1} parent=5 // pred_region
        %s287 = ssub.s32 %s27, 1
        // Predicated region
        $region13: #{tpu_custom_call.1} parent=11 // pred_check
          %p288 = pneg %p100
        $region14: #{tpu_custom_call.1} parent=11 // pred_check_branch
          %290 = sbr.rel (%p288) target = $region16
        $region15: #{tpu_custom_call.1} parent=11 // pred_region
          %292 = vsyncadd [#allocation6], 0
          %s293 = sshll.u32 %s2, 4
          %s294 = int_to_ptr.hbm [resolvable:$true] %s293
          %s295 = sshll.u32 [#allocation7], 4
          %s296 = int_to_ptr.vmem [resolvable:$true] %s295
          %301 = dma.hbm_to_vmem [thread:$0]  %s294, 1024, %s296, [#allocation6], 128, 128, 8
        $region16: #{tpu_custom_call.1} parent=11 // pred_fallthru
          _
        // Predicated region
        $region17: #{tpu_custom_call.1} parent=11 // pred_check
          %p302 = pneg %p121
        $region18: #{tpu_custom_call.1} parent=11 // pred_check_branch
          %304 = sbr.rel (%p302) target = $region20
        $region19: #{tpu_custom_call.1} parent=11 // pred_region
          _
        $region20: #{tpu_custom_call.1} parent=11 // pred_fallthru
          _
        // Predicated region
        $region21: #{tpu_custom_call.1} parent=11 // pred_check
          %p305 = pneg %p142
        $region22: #{tpu_custom_call.1} parent=11 // pred_check_branch
          %307 = sbr.rel (%p305) target = $region24
        $region23: #{tpu_custom_call.1} parent=11 // pred_region
          %309 = vsyncadd [#allocation9], 0
          %s310 = sshll.u32 %s4, 4
          %s311 = int_to_ptr.hbm [resolvable:$true] %s310
          %s312 = sshll.u32 [#allocation8], 4
          %s313 = int_to_ptr.vmem [resolvable:$true] %s312
          %318 = dma.hbm_to_vmem [thread:$0]  %s311, 1024, %s313, [#allocation9], 128, 128, 8
        $region24: #{tpu_custom_call.1} parent=11 // pred_fallthru
          _
        // Predicated region
        $region25: #{tpu_custom_call.1} parent=11 // pred_check
          %p319 = pneg %p163
        $region26: #{tpu_custom_call.1} parent=11 // pred_check_branch
          %321 = sbr.rel (%p319) target = $region28
        $region27: #{tpu_custom_call.1} parent=11 // pred_region
          _
        $region28: #{tpu_custom_call.1} parent=11 // pred_fallthru
          _
        // Predicated region
        $region29: #{tpu_custom_call.1} parent=11 // pred_check
          %p322 = pneg %p184
        $region30: #{tpu_custom_call.1} parent=11 // pred_check_branch
          %324 = sbr.rel (%p322) target = $region32
        $region31: #{tpu_custom_call.1} parent=11 // pred_region
          %326 = vsyncadd [#allocation9], 0
          %s327 = sshll.u32 %s6, 4
          %s328 = int_to_ptr.hbm [resolvable:$true] %s327
          %s329 = sshll.u32 [#allocation10], 4
          %s330 = int_to_ptr.vmem [resolvable:$true] %s329
          %335 = dma.hbm_to_vmem [thread:$0]  %s328, 1024, %s330, [#allocation9], 128, 128, 8
        $region32: #{tpu_custom_call.1} parent=11 // pred_fallthru
          _
        // Predicated region
        $region33: #{tpu_custom_call.1} parent=11 // pred_check
          %p336 = pneg %p205
        $region34: #{tpu_custom_call.1} parent=11 // pred_check_branch
          %338 = sbr.rel (%p336) target = $region36
        $region35: #{tpu_custom_call.1} parent=11 // pred_region
          _
        $region36: #{tpu_custom_call.1} parent=11 // pred_fallthru
          _
        // Predicated region
        $region37: #{tpu_custom_call.1} parent=11 // pred_check
          %p339 = pneg %p226
        $region38: #{tpu_custom_call.1} parent=11 // pred_check_branch
          %341 = sbr.rel (%p339) target = $region40
        $region39: #{tpu_custom_call.1} parent=11 // pred_region
          %343 = vsyncadd [#allocation12], 0
          %s344 = sshll.u32 %s8, 4
          %s345 = int_to_ptr.hbm [resolvable:$true] %s344
          %s346 = sshll.u32 [#allocation11], 4
          %s347 = int_to_ptr.vmem [resolvable:$true] %s346
          %352 = dma.hbm_to_vmem [thread:$0]  %s345, 1024, %s347, [#allocation12], 128, 128, 8
        $region40: #{tpu_custom_call.1} parent=11 // pred_fallthru
          _
        // Predicated region
        $region41: #{tpu_custom_call.1} parent=11 // pred_check
          %p353 = pneg %p247
        $region42: #{tpu_custom_call.1} parent=11 // pred_check_branch
          %355 = sbr.rel (%p353) target = $region44
        $region43: #{tpu_custom_call.1} parent=11 // pred_region
          _
        $region44: #{tpu_custom_call.1} parent=11 // pred_fallthru
          _
      $region12: #{tpu_custom_call.1} parent=5 // pred_fallthru
        _
      %p356 = scmp.lt.s32.totalorder %s27, 2
      // Predicated region
      $region45: #{tpu_custom_call.1} parent=5 // pred_check
        %p357 = pneg %p356
      $region46: #{tpu_custom_call.1} parent=5 // pred_check_branch
        %359 = sbr.rel (%p357) target = $region48
      $region47: #{tpu_custom_call.1} parent=5 // pred_region
        // Predicated region
        $region49: #{tpu_custom_call.1} parent=47 // pred_check
          %p360 = pneg %p47
        $region50: #{tpu_custom_call.1} parent=47 // pred_check_branch
          %362 = sbr.rel (%p360) target = $region52
        $region51: #{tpu_custom_call.1} parent=47 // pred_region
          %s363 = sand.u32 %s37, 1
          %s364 = scalar_lea.sflag [#allocation3], %s363
          %s365 = sand.u32 %s37, 1
          %s366 = smul.addr %s365, 8
          %s367 = scalar_lea.vmem [#allocation2], %s366
          %369 = vsyncadd %s364, 0
          %s370 = smul.addr %s27, 8
          %s371 = scalar_lea.hbm %s0, %s370
          %s373 = sshll.u32 %s371, 4
          %s374 = int_to_ptr.hbm [resolvable:$true] %s373
          %s375 = sshll.u32 %s367, 4
          %s376 = int_to_ptr.vmem [resolvable:$true] %s375
          %378 = dma.hbm_to_vmem [thread:$0]  %s374, 128, %s376, %s364
        $region52: #{tpu_custom_call.1} parent=47 // pred_fallthru
          _
        // Predicated region
        $region53: #{tpu_custom_call.1} parent=47 // pred_check
          %p379 = pneg %p73
        $region54: #{tpu_custom_call.1} parent=47 // pred_check_branch
          %381 = sbr.rel (%p379) target = $region56
        $region55: #{tpu_custom_call.1} parent=47 // pred_region
          %s382 = sand.u32 %s27, 1
          %s383 = scalar_lea.sflag [#allocation6], %s382
          %s384 = sand.u32 %s63, 1
          %s385 = smul.addr %s384, 8
          %s386 = scalar_lea.vmem [#allocation5], %s385
          %388 = vsyncadd %s383, 0
          %s389 = smul.addr %s27, 8
          %s390 = scalar_lea.hbm %s1, %s389
          %s392 = sshll.u32 %s390, 4
          %s393 = int_to_ptr.hbm [resolvable:$true] %s392
          %s394 = sshll.u32 %s386, 4
          %s395 = int_to_ptr.vmem [resolvable:$true] %s394
          %397 = dma.hbm_to_vmem [thread:$0]  %s393, 128, %s395, %s383
        $region56: #{tpu_custom_call.1} parent=47 // pred_fallthru
          _
      $region48: #{tpu_custom_call.1} parent=5 // pred_fallthru
        _
      %p398 = scmp.le.s32.totalorder 1, %s27
      %p399 = scmp.lt.s32.totalorder %s27, 3
      %p400 = pnand %p398, %p399
      %p401 = pneg %p400
      // Predicated region
      $region57: #{tpu_custom_call.1} parent=5 // pred_check
        _
      $region58: #{tpu_custom_call.1} parent=5 // pred_check_branch
        %403 = sbr.rel (%p400) target = $region60
      $region59: #{tpu_custom_call.1} parent=5 // pred_region
        %s404 = ssub.s32 %s27, 1
        %s405 = sand.u32 %s40, 1
        %s406 = scalar_lea.sflag [#allocation3], %s405
        %s407 = sand.u32 %s40, 1
        %s408 = smul.addr %s407, 8
        %s409 = scalar_lea.vmem [#allocation2], %s408
        // Predicated region
        $region61: #{tpu_custom_call.1} parent=59 // pred_check
          %p410 = pneg %p53
        $region62: #{tpu_custom_call.1} parent=59 // pred_check_branch
          %412 = sbr.rel (%p410) target = $region64
        $region63: #{tpu_custom_call.1} parent=59 // pred_region
          %414 = dma.done %s406, 128
        $region64: #{tpu_custom_call.1} parent=59 // pred_fallthru
          _
        %s415 = sand.u32 %s32, 1
        %s416 = scalar_lea.sflag [#allocation6], %s415
        %s417 = sand.u32 %s66, 1
        %s418 = smul.addr %s417, 8
        %s419 = scalar_lea.vmem [#allocation5], %s418
        // Predicated region
        $region65: #{tpu_custom_call.1} parent=59 // pred_check
          %p420 = pneg %p79
        $region66: #{tpu_custom_call.1} parent=59 // pred_check_branch
          %422 = sbr.rel (%p420) target = $region68
        $region67: #{tpu_custom_call.1} parent=59 // pred_region
          %424 = dma.done %s416, 128
        $region68: #{tpu_custom_call.1} parent=59 // pred_fallthru
          _
        // Predicated region
        $region69: #{tpu_custom_call.1} parent=59 // pred_check
          %p425 = pneg %p100
        $region70: #{tpu_custom_call.1} parent=59 // pred_check_branch
          %427 = sbr.rel (%p425) target = $region72
        $region71: #{tpu_custom_call.1} parent=59 // pred_region
          %429 = dma.done [#allocation6], 1024
        $region72: #{tpu_custom_call.1} parent=59 // pred_fallthru
          _
        // Predicated region
        $region73: #{tpu_custom_call.1} parent=59 // pred_check
          %p430 = pneg %p142
        $region74: #{tpu_custom_call.1} parent=59 // pred_check_branch
          %432 = sbr.rel (%p430) target = $region76
        $region75: #{tpu_custom_call.1} parent=59 // pred_region
          %434 = dma.done [#allocation9], 1024
        $region76: #{tpu_custom_call.1} parent=59 // pred_fallthru
          _
        // Predicated region
        $region77: #{tpu_custom_call.1} parent=59 // pred_check
          %p435 = pneg %p184
        $region78: #{tpu_custom_call.1} parent=59 // pred_check_branch
          %437 = sbr.rel (%p435) target = $region80
        $region79: #{tpu_custom_call.1} parent=59 // pred_region
          %439 = dma.done [#allocation9], 1024
        $region80: #{tpu_custom_call.1} parent=59 // pred_fallthru
          _
        // Predicated region
        $region81: #{tpu_custom_call.1} parent=59 // pred_check
          %p440 = pneg %p226
        $region82: #{tpu_custom_call.1} parent=59 // pred_check_branch
          %442 = sbr.rel (%p440) target = $region84
        $region83: #{tpu_custom_call.1} parent=59 // pred_region
          %444 = dma.done [#allocation12], 1024
        $region84: #{tpu_custom_call.1} parent=59 // pred_fallthru
          _
        %s445 = sand.u32 %s40, 1
        %s446 = scalar_lea.sflag [#allocation3], %s445
        %s447 = sand.u32 %s40, 1
        %s448 = smul.addr %s447, 8
        %s449 = scalar_lea.vmem [#allocation2], %s448
        %p450 = pneg %p53
        %p451 = pneg %p50
        %s452 = sand.u32 %s32, 1
        %s453 = scalar_lea.sflag [#allocation6], %s452
        %s454 = sand.u32 %s66, 1
        %s455 = smul.addr %s454, 8
        %s456 = scalar_lea.vmem [#allocation5], %s455
        %p457 = pneg %p79
        %p458 = pneg %p76
        %p459 = pneg %p100
        %p460 = pneg %p97
        %p461 = pneg %p121
        %p462 = pneg %p118
        %p463 = pneg %p142
        %p464 = pneg %p139
        %p465 = pneg %p163
        %p466 = pneg %p160
        %p467 = pneg %p184
        %p468 = pneg %p181
        %p469 = pneg %p205
        %p470 = pneg %p202
        %p471 = pneg %p226
        %p472 = pneg %p223
        %p473 = pneg %p247
        %p474 = pneg %p244
        %p475 = pneg %p273
        %p476 = pneg %p270
        %s477 = sand.u32 %s260, 1
        %s478 = scalar_lea.sflag [#allocation4], %s477
        %s479 = sand.u32 %s260, 1
        %s480 = smul.addr %s479, 8
        %s481 = scalar_lea.vmem [#allocation13], %s480
        %v482 = vld [vmem:[%s409] sm:$0xff]
        %v483 = vld [vmem:[%s419] sm:$0xff]
        %v484 = vld [vmem:[#allocation7] sm:$0xff]
        %v485 = vld [vmem:[#allocation7 + $0x8] sm:$0xff]
        %v486 = vld [vmem:[#allocation7 + $0x10] sm:$0xff]
        %v487 = vld [vmem:[#allocation7 + $0x18] sm:$0xff]
        %v488 = vld [vmem:[#allocation7 + $0x20] sm:$0xff]
        %v489 = vld [vmem:[#allocation7 + $0x28] sm:$0xff]
        %v490 = vld [vmem:[#allocation7 + $0x30] sm:$0xff]
        %v491 = vld [vmem:[#allocation7 + $0x38] sm:$0xff]
        %v492 = vld [vmem:[%s3] sm:$0x1]
        %v494 = vperm.slane %v492, 0
        %vm496 = vcmask 523264
        %v498 = vsel %vm496, %v482, 0
        %500 = vmatpush.msra.mxu0 0.0
        %501 = vmatpush.msra.mxu0 0.0
        %502 = vmatpush.msra.mxu0 0.0
        %503 = vmatpush.msra.mxu0 0.0
        %504 = vmatpush.msra.mxu0 0.0
        %505 = vmatpush.msra.mxu0 0.0
        %506 = vmatpush.msra.mxu0 0.0
        %507 = vmatpush.msra.mxu0 0.0
        %508 = vmatpush.msra.mxu0 %v491
        %509 = vmatpush.msra.mxu0 %v490
        %510 = vmatpush.msra.mxu0 %v489
        %511 = vmatpush.msra.mxu0 %v488
        %512 = vmatpush.msra.mxu0 %v487
        %513 = vmatpush.msra.mxu0 %v486
        %514 = vmatpush.msra.mxu0 %v485
        %515 = vmatpush.msra.mxu0 %v484
        %516 = vmatmul.f32.gmra.mxu0 %v498
        %v517 = vpop.f32.mrf.mxu0
        %v518 = vadd.f32 %v494, %v517
        %519 = vdwg.mxu0
        %v520 = vld [vmem:[#allocation8] sm:$0xff]
        %v521 = vld [vmem:[#allocation8 + $0x8] sm:$0xff]
        %v522 = vld [vmem:[#allocation8 + $0x10] sm:$0xff]
        %v523 = vld [vmem:[#allocation8 + $0x18] sm:$0xff]
        %v524 = vld [vmem:[#allocation8 + $0x20] sm:$0xff]
        %v525 = vld [vmem:[#allocation8 + $0x28] sm:$0xff]
        %v526 = vld [vmem:[#allocation8 + $0x30] sm:$0xff]
        %v527 = vld [vmem:[#allocation8 + $0x38] sm:$0xff]
        %v528 = vld [vmem:[%s5] sm:$0x1]
        %v530 = vperm.slane %v528, 0
        %v533 = vsel %vm496, %v483, 0
        %535 = vmatpush.msra.mxu0 0.0
        %536 = vmatpush.msra.mxu0 0.0
        %537 = vmatpush.msra.mxu0 0.0
        %538 = vmatpush.msra.mxu0 0.0
        %539 = vmatpush.msra.mxu0 0.0
        %540 = vmatpush.msra.mxu0 0.0
        %541 = vmatpush.msra.mxu0 0.0
        %542 = vmatpush.msra.mxu0 0.0
        %543 = vmatpush.msra.mxu0 %v527
        %544 = vmatpush.msra.mxu0 %v526
        %545 = vmatpush.msra.mxu0 %v525
        %546 = vmatpush.msra.mxu0 %v524
        %547 = vmatpush.msra.mxu0 %v523
        %548 = vmatpush.msra.mxu0 %v522
        %549 = vmatpush.msra.mxu0 %v521
        %550 = vmatpush.msra.mxu0 %v520
        %551 = vmatmul.f32.gmra.mxu0 %v533
        %v552 = vpop.f32.mrf.mxu0
        %v553 = vadd.f32 %v530, %v552
        %554 = vdwg.mxu0
        %v555 = vmul.f32 %v553, %v518
        %556 = vadd.xlane.f32.xlu0 %v555
        %v557 = vpop.xlane.xlu0 %556
        %v558 = vtanh.pop %v557
        %v559 = vld [vmem:[#allocation10] sm:$0xff]
        %v560 = vld [vmem:[#allocation10 + $0x8] sm:$0xff]
        %v561 = vld [vmem:[#allocation10 + $0x10] sm:$0xff]
        %v562 = vld [vmem:[#allocation10 + $0x18] sm:$0xff]
        %v563 = vld [vmem:[#allocation10 + $0x20] sm:$0xff]
        %v564 = vld [vmem:[#allocation10 + $0x28] sm:$0xff]
        %v565 = vld [vmem:[#allocation10 + $0x30] sm:$0xff]
        %v566 = vld [vmem:[#allocation10 + $0x38] sm:$0xff]
        %v567 = vld [vmem:[%s7] sm:$0x1]
        %v569 = vperm.slane %v567, 0
        %571 = vmatpush.msra.mxu0 0.0
        %572 = vmatpush.msra.mxu0 0.0
        %573 = vmatpush.msra.mxu0 0.0
        %574 = vmatpush.msra.mxu0 0.0
        %575 = vmatpush.msra.mxu0 0.0
        %576 = vmatpush.msra.mxu0 0.0
        %577 = vmatpush.msra.mxu0 0.0
        %578 = vmatpush.msra.mxu0 0.0
        %579 = vmatpush.msra.mxu0 %v566
        %580 = vmatpush.msra.mxu0 %v565
        %581 = vmatpush.msra.mxu0 %v564
        %582 = vmatpush.msra.mxu0 %v563
        %583 = vmatpush.msra.mxu0 %v562
        %584 = vmatpush.msra.mxu0 %v561
        %585 = vmatpush.msra.mxu0 %v560
        %586 = vmatpush.msra.mxu0 %v559
        %587 = vmatmul.f32.gmra.mxu0 %v498
        %v588 = vpop.f32.mrf.mxu0
        %v589 = vadd.f32 %v569, %v588
        %590 = vdwg.mxu0
        %v591 = vld [vmem:[#allocation11] sm:$0xff]
        %v592 = vld [vmem:[#allocation11 + $0x8] sm:$0xff]
        %v593 = vld [vmem:[#allocation11 + $0x10] sm:$0xff]
        %v594 = vld [vmem:[#allocation11 + $0x18] sm:$0xff]
        %v595 = vld [vmem:[#allocation11 + $0x20] sm:$0xff]
        %v596 = vld [vmem:[#allocation11 + $0x28] sm:$0xff]
        %v597 = vld [vmem:[#allocation11 + $0x30] sm:$0xff]
        %v598 = vld [vmem:[#allocation11 + $0x38] sm:$0xff]
        %v599 = vld [vmem:[%s9] sm:$0x1]
        %v601 = vperm.slane %v599, 0
        %603 = vmatpush.msra.mxu0 0.0
        %604 = vmatpush.msra.mxu0 0.0
        %605 = vmatpush.msra.mxu0 0.0
        %606 = vmatpush.msra.mxu0 0.0
        %607 = vmatpush.msra.mxu0 0.0
        %608 = vmatpush.msra.mxu0 0.0
        %609 = vmatpush.msra.mxu0 0.0
        %610 = vmatpush.msra.mxu0 0.0
        %611 = vmatpush.msra.mxu0 %v598
        %612 = vmatpush.msra.mxu0 %v597
        %613 = vmatpush.msra.mxu0 %v596
        %614 = vmatpush.msra.mxu0 %v595
        %615 = vmatpush.msra.mxu0 %v594
        %616 = vmatpush.msra.mxu0 %v593
        %617 = vmatpush.msra.mxu0 %v592
        %618 = vmatpush.msra.mxu0 %v591
        %619 = vmatmul.f32.gmra.mxu0 %v498
        %v620 = vpop.f32.mrf.mxu0
        %v621 = vadd.f32 %v601, %v620
        %622 = vdwg.mxu0
        %v623 = vsub.f32 1.0, %v558
        %v624 = vmul.f32 %v623, %v621
        %v625 = vadd.f32 %v589, %v624
        %v626 = vxor.u32 %v625, 2147483648
        %v627 = vmul.f32 %v626, 1.442695
        %v628 = vpow.pop %v627
        %v629 = vadd.f32 %v628, 1.0
        %v630 = vrcp.pop %v629
        %v631 = vmul.f32 %v629, %v630
        %v632 = vsub.f32 1.0, %v631
        %v633 = vmul.f32 %v630, %v632
        %v634 = vadd.f32 %v630, %v633
        %vm635 = vweird.f32 %v629
        %vm636 = vweird.f32 %v630
        %vm637 = vmor %vm635, %vm636
        %v638 = vsel %vm637, %v630, %v634
        %v639 = vand.u32 2147483647, %v629
        %vm640 = vcmp.eq.f32.partialorder %v639, 8.507059e+37
        %v641 = vand.u32 %v629, 2147483648
        %v642 = vor.u32 1.1754944e-38, %v641
        %v643 = vsel %vm640, %v642, %v638
        %v644 = vmul.f32 1.0, %v643
        %645 = vst [vmem:[%s481] sm:$0xff] %v644
        %s646 = sand.u32 %s260, 1
        %s647 = scalar_lea.sflag [#allocation4], %s646
        %s648 = sand.u32 %s260, 1
        %s649 = smul.addr %s648, 8
        %s650 = scalar_lea.vmem [#allocation13], %s649
        // Predicated region
        $region85: #{tpu_custom_call.1} parent=59 // pred_check
          %p651 = pneg %p270
        $region86: #{tpu_custom_call.1} parent=59 // pred_check_branch
          %653 = sbr.rel (%p651) target = $region88
        $region87: #{tpu_custom_call.1} parent=59 // pred_region
          %655 = vsyncadd %s647, 0
          %s656 = smul.addr %s32, 8
          %s657 = scalar_lea.hbm %s10, %s656
          %s659 = sshll.u32 %s650, 4
          %s660 = int_to_ptr.vmem [resolvable:$true] %s659
          %s661 = sshll.u32 %s657, 4
          %s662 = int_to_ptr.hbm [resolvable:$true] %s661
          %664 = dma.vmem_to_hbm [thread:$0]  %s660, 128, %s662, %s647
        $region88: #{tpu_custom_call.1} parent=59 // pred_fallthru
          _
      $region60: #{tpu_custom_call.1} parent=5 // pred_fallthru
        _
      %p665 = scmp.le.s32.totalorder 2, %s27
      // Predicated region
      $region89: #{tpu_custom_call.1} parent=5 // pred_check
        %p666 = pneg %p665
      $region90: #{tpu_custom_call.1} parent=5 // pred_check_branch
        %668 = sbr.rel (%p666) target = $region92
      $region91: #{tpu_custom_call.1} parent=5 // pred_region
        %s669 = ssub.s32 %s27, 2
        // Predicated region
        $region93: #{tpu_custom_call.1} parent=91 // pred_check
          %p670 = pneg %p276
        $region94: #{tpu_custom_call.1} parent=91 // pred_check_branch
          %672 = sbr.rel (%p670) target = $region96
        $region95: #{tpu_custom_call.1} parent=91 // pred_region
          %s673 = sand.u32 %s261, 1
          %s674 = scalar_lea.sflag [#allocation4], %s673
          %s675 = sand.u32 %s261, 1
          %s676 = smul.addr %s675, 8
          %s677 = scalar_lea.vmem [#allocation13], %s676
          %679 = dma.done %s674, 128
        $region96: #{tpu_custom_call.1} parent=91 // pred_fallthru
          _
      $region92: #{tpu_custom_call.1} parent=5 // pred_fallthru
        _
    $region6: #{tpu_custom_call.1} parent=1 // loop_footer
      %s31 = sadd.s32 1, %s27
    $region7: #{tpu_custom_call.1} parent=1 // loop_footer_branch
      %26 = sbr.rel target = $region3
    $region8: #{tpu_custom_call.1} parent=1 // loop_exit
      _
    %680 = vsyncpa [#allocation3], 1
    %s681 = scalar_lea.sflag [#allocation3], 1
    %682 = vsyncpa %s681, 1
    %683 = vsyncpa [#allocation6], 1
    %s684 = scalar_lea.sflag [#allocation6], 1
    %685 = vsyncpa %s684, 1
    %686 = vsyncpa [#allocation9], 1
    %687 = vsyncpa [#allocation12], 1
    %688 = vsyncpa [#allocation4], 1
    %s689 = scalar_lea.sflag [#allocation4], 1
    %690 = vsyncpa %s689, 1

</llo_original>
